<compile_context>
chip_gen: v7x
topology: tpu7x:2x2x1
jax: 0.10.0
libtpu: 0.0.40
codegen_flags: <defaults>
</compile_context>

<pallas_src>
import jax
import jax.numpy as jnp
import numpy as np
from jax.experimental import pallas as pl
from jax.experimental.pallas import tpu as pltpu

HIDDEN_CHANNELS = 16
NUM_FEATURES = 4

# ---------------------------------------------------------------------------
# Static row offsets inside the packed parameter slab (width = HIDDEN_CHANNELS,
# every segment padded to a multiple of 8 rows so all carve-outs are
# sublane-tile aligned).
# ---------------------------------------------------------------------------
_C1W, _C2W, _C3W, _F1A, _F1B, _F2W, _F3W, _BIAS = 0, 8, 24, 40, 56, 64, 80, 88
_SLAB_ROWS = 96  # 6 KiB f32 -> a single tiny DMA for all parameters


# ---------------------------------------------------------------------------
# Fused kernel: whole forward pass for ONE mini-batch (grid step).
# ---------------------------------------------------------------------------
def _make_kernel(num_graphs, nodes_per_graph):
    H = HIDDEN_CHANNELS
    bf16 = jnp.bfloat16

    def kernel(a_ref, x_ref, y_ref, w_ref, o_ref):
        w = w_ref[...]                                  # [96, 16] f32, one load

        # Static carve-outs of the packed parameter slab.
        # bf16 only for MXU operands; biases / epilogues stay f32 (v5e-safe).
        c1w = w[_C1W:_C1W + NUM_FEATURES].astype(bf16)  # [4,  H]
        c2w = w[_C2W:_C2W + H].astype(bf16)             # [H,  H]
        c3w = w[_C3W:_C3W + H].astype(bf16)             # [H,  H]
        f1a = w[_F1A:_F1A + H].astype(bf16)             # [H,  H]  (pooled part)
        f1b = w[_F1B:_F1B + 4].astype(bf16)             # [4,  H]  (y part)
        f2w = w[_F2W:_F2W + H].astype(bf16)             # [H,  H]
        w3 = w[_F3W:_F3W + 1]                           # [1,  H]  f32 (VPU fc3)

        def bias_row(i):                                # [1, H] f32
            return w[_BIAS + i:_BIAS + i + 1]

        a = a_ref[0].astype(bf16)                       # [N, N] normalized adj
        y = y_ref[0].astype(bf16)                       # [G, 4]

        def gcn(h_bf, wmat, bias):
            # (H @ W) FIRST, then A_hat @ (HW): O(N^2*H), not O(N^3).
            hw = jnp.dot(h_bf, wmat, preferred_element_type=jnp.float32)
            agg = jnp.dot(a, hw.astype(bf16),
                          preferred_element_type=jnp.float32)
            return jnp.maximum(agg + bias, 0.0)         # f32 epilogue

        h = gcn(x_ref[0].astype(bf16), c1w, bias_row(0))        # [N, H]
        h = gcn(h.astype(bf16), c2w, bias_row(1))               # [N, H]
        h = gcn(h.astype(bf16), c3w, bias_row(2))               # [N, H]

        # global_add_pool as a contiguous segment-sum (VPU sublane reduce),
        # not an MXU matmul. Graphs are contiguous & equal-sized.
        pooled = jnp.concatenate(
            [jnp.sum(h[g * nodes_per_graph:(g + 1) * nodes_per_graph],
                     axis=0, keepdims=True)
             for g in range(num_graphs)],
            axis=0)                                              # [G, H] f32

        # concat([pooled, y], 1) @ W1 == pooled @ W1[:H] + y @ W1[H:]
        h1 = jnp.maximum(
            jnp.dot(pooled.astype(bf16), f1a,
                    preferred_element_type=jnp.float32)
            + jnp.dot(y, f1b, preferred_element_type=jnp.float32)
            + bias_row(3), 0.0)                                  # [G, H]
        h2 = jnp.maximum(
            jnp.dot(h1.astype(bf16), f2w,
                    preferred_element_type=jnp.float32)
            + bias_row(4), 0.0)                                  # [G, H]

        # fc3 as VPU multiply + lane reduce (1-lane output: skip the MXU).
        out = (jnp.sum(h2 * w3, axis=-1, keepdims=True)
               + w[_BIAS + 5:_BIAS + 6, 0:1])                    # [G, 1]
        o_ref[0] = out

    return kernel


@jax.jit
def net_forward(w_slab, a_hat, x, y):
    """Fused forward over a batch of independent mini-batches.

    a_hat: [B, N, N]  precomputed D^-1/2 (A+I) D^-1/2 (block-diag per batch)
    x:     [B, N, F]  node features
    y:     [B, G, 4]  per-graph extra features
    w_slab:[96, 16]   packed parameters (ONE DMA)
    """
    B, N, _ = a_hat.shape
    G = y.shape[1]
    kernel = _make_kernel(G, N // G)
    return pl.pallas_call(
        kernel,
        out_shape=jax.ShapeDtypeStruct((B, G, 1), jnp.float32),
        grid=(B,),
        in_specs=[
            pl.BlockSpec((1, N, N), lambda b: (b, 0, 0)),
            pl.BlockSpec((1, N, NUM_FEATURES), lambda b: (b, 0, 0)),
            pl.BlockSpec((1, G, 4), lambda b: (b, 0, 0)),
            # Constant block index -> weight slab stays VMEM-resident.
            pl.BlockSpec((_SLAB_ROWS, HIDDEN_CHANNELS), lambda b: (0, 0)),
        ],
        out_specs=pl.BlockSpec((1, G, 1), lambda b: (b, 0, 0)),
        compiler_params=pltpu.CompilerParams(
            dimension_semantics=("parallel",)),   # v7x: both TensorCores
    )(a_hat, x, y, w_slab)


# ---------------------------------------------------------------------------
# Host-side (once per graph structure): normalized adjacency
# ---------------------------------------------------------------------------
def build_norm_adj(edge_index, num_nodes):
    """Dense A_hat = D^-1/2 (A + I) D^-1/2 with A[dst, src] = 1.

    NOTE: matches PyG GCNConv only for symmetric edge_index (edges inserted in
    both directions, as in the demo).
    """
    src = np.asarray(edge_index[0])
    dst = np.asarray(edge_index[1])
    a = np.zeros((num_nodes, num_nodes), np.float32)
    a[dst, src] = 1.0
    np.fill_diagonal(a, 1.0)                     # self loops
    deg = a.sum(axis=1)
    dinv = np.where(deg > 0, 1.0 / np.sqrt(deg), 0.0).astype(np.float32)
    return jnp.asarray(dinv[:, None] * a * dinv[None, :])


# ---------------------------------------------------------------------------
# Parameters (fc1 weight stored pre-split) + host-side packing into ONE slab
# ---------------------------------------------------------------------------
def init_params(key, num_features, hidden_channels):
    ks = jax.random.split(key, 12)
    scale = 0.1

    def w(k, shape):
        return scale * jax.random.normal(k, shape, jnp.float32)

    fc1_w = w(ks[6], (hidden_channels + 4, hidden_channels))
    return {
        "conv1_w": w(ks[0], (num_features, hidden_channels)),
        "conv1_b": w(ks[1], (1, hidden_channels)),
        "conv2_w": w(ks[2], (hidden_channels, hidden_channels)),
        "conv2_b": w(ks[3], (1, hidden_channels)),
        "conv3_w": w(ks[4], (hidden_channels, hidden_channels)),
        "conv3_b": w(ks[5], (1, hidden_channels)),
        "fc1_wa": fc1_w[:hidden_channels],       # pooled part  [H, H]
        "fc1_wb": fc1_w[hidden_channels:],       # y part       [4, H]
        "fc1_b": w(ks[7], (1, hidden_channels)),
        "fc2_w": w(ks[8], (hidden_channels, hidden_channels)),
        "fc2_b": w(ks[9], (1, hidden_channels)),
        "fc3_w": w(ks[10], (hidden_channels, 1)),
        "fc3_b": w(ks[11], (1, 1)),
    }


def pack_params(params):
    """Pack all 13 parameter tensors into one [96, 16] f32 slab (one DMA)."""
    H = HIDDEN_CHANNELS
    slab = np.zeros((_SLAB_ROWS, H), np.float32)
    slab[_C1W:_C1W + NUM_FEATURES] = np.asarray(params["conv1_w"])
    slab[_C2W:_C2W + H] = np.asarray(params["conv2_w"])
    slab[_C3W:_C3W + H] = np.asarray(params["conv3_w"])
    slab[_F1A:_F1A + H] = np.asarray(params["fc1_wa"])
    slab[_F1B:_F1B + 4] = np.asarray(params["fc1_wb"])
    slab[_F2W:_F2W + H] = np.asarray(params["fc2_w"])
    slab[_F3W] = np.asarray(params["fc3_w"])[:, 0]          # fc3 as a row
    slab[_BIAS + 0] = np.asarray(params["conv1_b"])[0]
    slab[_BIAS + 1] = np.asarray(params["conv2_b"])[0]
    slab[_BIAS + 2] = np.asarray(params["conv3_b"])[0]
    slab[_BIAS + 3] = np.asarray(params["fc1_b"])[0]
    slab[_BIAS + 4] = np.asarray(params["fc2_b"])[0]
    slab[_BIAS + 5, 0] = float(np.asarray(params["fc3_b"])[0, 0])
    return jnp.asarray(slab)


# ---------------------------------------------------------------------------
# Plain-JAX reference (mirrors the kernel's bf16 MXU operands exactly)
# ---------------------------------------------------------------------------
def net_forward_ref(params, a_hat, x, y, num_graphs):
    bf = jnp.bfloat16

    def one(a, xb, yb):
        h = xb
        for i in (1, 2, 3):
            hw = jnp.dot(h.astype(bf), params[f"conv{i}_w"].astype(bf),
                         preferred_element_type=jnp.float32)
            h = jnp.maximum(
                jnp.dot(a.astype(bf), hw.astype(bf),
                        preferred_element_type=jnp.float32)
                + params[f"conv{i}_b"], 0.0)
        npg = h.shape[0] // num_graphs
        pooled = h.reshape(num_graphs, npg, -1).sum(axis=1)
        h1 = jnp.maximum(
            jnp.dot(pooled.astype(bf), params["fc1_wa"].astype(bf),
                    preferred_element_type=jnp.float32)
            + jnp.dot(yb.astype(bf), params["fc1_wb"].astype(bf),
                      preferred_element_type=jnp.float32)
            + params["fc1_b"], 0.0)
        h2 = jnp.maximum(
            jnp.dot(h1.astype(bf), params["fc2_w"].astype(bf),
                    preferred_element_type=jnp.float32)
            + params["fc2_b"], 0.0)
        w3 = params["fc3_w"][:, 0][None, :]
        return jnp.sum(h2 * w3, axis=-1, keepdims=True) + params["fc3_b"]

    return jax.vmap(one)(a_hat, x, y)


if __name__ == "__main__":
    key = jax.random.PRNGKey(0)
    k_param, k_x, k_y = jax.random.split(key, 3)

    batch_size = 4          # independent mini-batches -> "parallel" grid axis
    num_graphs = 2          # graphs per mini-batch (block-diagonal adjacency)
    nodes_per_graph = 8
    num_nodes = num_graphs * nodes_per_graph   # 16

    # Two chain graphs of 8 nodes each, edges in both directions (symmetric).
    src, dst = [], []
    for g in range(num_graphs):
        base = g * nodes_per_graph
        for i in range(nodes_per_graph - 1):
            src += [base + i, base + i + 1]
            dst += [base + i + 1, base + i]
    edge_index = np.array([src, dst], dtype=np.int32)                  # [2, E]
    batch_vec = np.repeat(np.arange(num_graphs, dtype=np.int32),
                          nodes_per_graph)                             # [N]
    # Segment-sum pooling assumes contiguous, equal-sized graphs.
    assert np.array_equal(
        batch_vec, np.repeat(np.arange(num_graphs), nodes_per_graph))

    # Built ONCE per graph structure, outside the jitted per-call path.
    a_hat_one = build_norm_adj(edge_index, num_nodes)                  # [N, N]
    a_hat = jnp.tile(a_hat_one[None], (batch_size, 1, 1))              # [B,N,N]

    x = jax.random.normal(k_x, (batch_size, num_nodes, NUM_FEATURES),
                          jnp.float32)                                 # [B,N,4]
    y = jax.random.normal(k_y, (batch_size, num_graphs, 4),
                          jnp.float32)                                 # [B,G,4]

    params = init_params(k_param, NUM_FEATURES, HIDDEN_CHANNELS)
    w_slab = pack_params(params)      # ONE DMA for all 13 parameter tensors

    out = net_forward(w_slab, a_hat, x, y)
    jax.block_until_ready(out)
    assert out.shape == (batch_size, num_graphs, 1)

    ref = net_forward_ref(params, a_hat, x, y, num_graphs)
    assert jnp.allclose(out, ref, rtol=1e-2, atol=1e-3), (out, ref)

    print("KERNEL_OK")
</pallas_src>

<mosaic_0001>
module attributes {stable_mosaic.version = 11 : i64} {
  func.func @kernel(%arg0: i32, %arg1: memref<1x16x16xf32, #tpu.memory_space<vmem>>, %arg2: memref<1x16x4xf32, #tpu.memory_space<vmem>>, %arg3: memref<1x2x4xf32, #tpu.memory_space<vmem>>, %arg4: memref<96x16xf32, #tpu.memory_space<vmem>>, %arg5: memref<1x2x1xf32, #tpu.memory_space<vmem>>) attributes {dimension_semantics = [#tpu.dimension_semantics<parallel>], iteration_bounds = array<i64: 4>, scalar_prefetch = 0 : i64, scratch_operands = 0 : i64, tpu.core_type = #tpu.core_type<tc>, window_params = [{transform_indices = @transform_0, window_bounds = array<i64: 1, 16, 16>}, {transform_indices = @transform_1, window_bounds = array<i64: 1, 16, 4>}, {transform_indices = @transform_2, window_bounds = array<i64: 1, 2, 4>}, {pipeline_mode = #tpu.pipeline_mode<synchronous>, transform_indices = @transform_3, window_bounds = array<i64: 96, 16>}, {transform_indices = @transform_4, window_bounds = array<i64: 1, 2, 1>}]} {
    %c0 = arith.constant 0 : index
    %c0_0 = arith.constant 0 : index
    %0 = vector.load %arg4[%c0, %c0_0] : memref<96x16xf32, #tpu.memory_space<vmem>>, vector<96x16xf32>
    %1 = vector.extract_strided_slice %0 {offsets = [0, 0], sizes = [4, 16], strides = [1, 1]} : vector<96x16xf32> to vector<4x16xf32>
    %2 = arith.truncf %1 : vector<4x16xf32> to vector<4x16xbf16>
    %3 = vector.extract_strided_slice %0 {offsets = [8, 0], sizes = [16, 16], strides = [1, 1]} : vector<96x16xf32> to vector<16x16xf32>
    %4 = arith.truncf %3 : vector<16x16xf32> to vector<16x16xbf16>
    %5 = vector.extract_strided_slice %0 {offsets = [24, 0], sizes = [16, 16], strides = [1, 1]} : vector<96x16xf32> to vector<16x16xf32>
    %6 = arith.truncf %5 : vector<16x16xf32> to vector<16x16xbf16>
    %7 = vector.extract_strided_slice %0 {offsets = [40, 0], sizes = [16, 16], strides = [1, 1]} : vector<96x16xf32> to vector<16x16xf32>
    %8 = arith.truncf %7 : vector<16x16xf32> to vector<16x16xbf16>
    %9 = vector.extract_strided_slice %0 {offsets = [56, 0], sizes = [4, 16], strides = [1, 1]} : vector<96x16xf32> to vector<4x16xf32>
    %10 = arith.truncf %9 : vector<4x16xf32> to vector<4x16xbf16>
    %11 = vector.extract_strided_slice %0 {offsets = [64, 0], sizes = [16, 16], strides = [1, 1]} : vector<96x16xf32> to vector<16x16xf32>
    %12 = arith.truncf %11 : vector<16x16xf32> to vector<16x16xbf16>
    %13 = vector.extract_strided_slice %0 {offsets = [80, 0], sizes = [1, 16], strides = [1, 1]} : vector<96x16xf32> to vector<1x16xf32>
    %c0_1 = arith.constant 0 : index
    %c0_2 = arith.constant 0 : index
    %c0_3 = arith.constant 0 : index
    %14 = vector.load %arg1[%c0_1, %c0_2, %c0_3] : memref<1x16x16xf32, #tpu.memory_space<vmem>>, vector<1x16x16xf32>
    %15 = vector.shape_cast %14 : vector<1x16x16xf32> to vector<16x16xf32>
    %16 = arith.truncf %15 : vector<16x16xf32> to vector<16x16xbf16>
    %c0_4 = arith.constant 0 : index
    %c0_5 = arith.constant 0 : index
    %c0_6 = arith.constant 0 : index
    %17 = vector.load %arg3[%c0_4, %c0_5, %c0_6] : memref<1x2x4xf32, #tpu.memory_space<vmem>>, vector<1x2x4xf32>
    %18 = vector.shape_cast %17 : vector<1x2x4xf32> to vector<2x4xf32>
    %19 = arith.truncf %18 : vector<2x4xf32> to vector<2x4xbf16>
    %c0_7 = arith.constant 0 : index
    %c0_8 = arith.constant 0 : index
    %c0_9 = arith.constant 0 : index
    %20 = vector.load %arg2[%c0_7, %c0_8, %c0_9] : memref<1x16x4xf32, #tpu.memory_space<vmem>>, vector<1x16x4xf32>
    %21 = vector.shape_cast %20 : vector<1x16x4xf32> to vector<16x4xf32>
    %22 = arith.truncf %21 : vector<16x4xf32> to vector<16x4xbf16>
    %23 = vector.extract_strided_slice %0 {offsets = [88, 0], sizes = [1, 16], strides = [1, 1]} : vector<96x16xf32> to vector<1x16xf32>
    %cst = arith.constant dense<0.000000e+00> : vector<16x16xf32>
    %24 = tpu.matmul %22, %2, %cst {dimension_numbers = #tpu.dot_dimension_numbers<[1], [0], [0], [1], [0, 0, 1, 1], [], []>} : vector<16x4xbf16>, vector<4x16xbf16>, vector<16x16xf32> -> vector<16x16xf32>
    %25 = arith.truncf %24 : vector<16x16xf32> to vector<16x16xbf16>
    %cst_10 = arith.constant dense<0.000000e+00> : vector<16x16xf32>
    %26 = tpu.matmul %16, %25, %cst_10 {dimension_numbers = #tpu.dot_dimension_numbers<[1], [0], [0], [1], [0, 0, 1, 1], [], []>} : vector<16x16xbf16>, vector<16x16xbf16>, vector<16x16xf32> -> vector<16x16xf32>
    %27 = vector.broadcast %23 : vector<1x16xf32> to vector<16x16xf32>
    %28 = arith.addf %26, %27 : vector<16x16xf32>
    %cst_11 = arith.constant 0.000000e+00 : f32
    %29 = vector.broadcast %cst_11 : f32 to vector<16x16xf32>
    %30 = arith.maximumf %28, %29 : vector<16x16xf32>
    %31 = arith.truncf %30 : vector<16x16xf32> to vector<16x16xbf16>
    %32 = vector.extract_strided_slice %0 {offsets = [89, 0], sizes = [1, 16], strides = [1, 1]} : vector<96x16xf32> to vector<1x16xf32>
    %cst_12 = arith.constant dense<0.000000e+00> : vector<16x16xf32>
    %33 = tpu.matmul %31, %4, %cst_12 {dimension_numbers = #tpu.dot_dimension_numbers<[1], [0], [0], [1], [0, 0, 1, 1], [], []>} : vector<16x16xbf16>, vector<16x16xbf16>, vector<16x16xf32> -> vector<16x16xf32>
    %34 = arith.truncf %33 : vector<16x16xf32> to vector<16x16xbf16>
    %cst_13 = arith.constant dense<0.000000e+00> : vector<16x16xf32>
    %35 = tpu.matmul %16, %34, %cst_13 {dimension_numbers = #tpu.dot_dimension_numbers<[1], [0], [0], [1], [0, 0, 1, 1], [], []>} : vector<16x16xbf16>, vector<16x16xbf16>, vector<16x16xf32> -> vector<16x16xf32>
    %36 = vector.broadcast %32 : vector<1x16xf32> to vector<16x16xf32>
    %37 = arith.addf %35, %36 : vector<16x16xf32>
    %cst_14 = arith.constant 0.000000e+00 : f32
    %38 = vector.broadcast %cst_14 : f32 to vector<16x16xf32>
    %39 = arith.maximumf %37, %38 : vector<16x16xf32>
    %40 = arith.truncf %39 : vector<16x16xf32> to vector<16x16xbf16>
    %41 = vector.extract_strided_slice %0 {offsets = [90, 0], sizes = [1, 16], strides = [1, 1]} : vector<96x16xf32> to vector<1x16xf32>
    %cst_15 = arith.constant dense<0.000000e+00> : vector<16x16xf32>
    %42 = tpu.matmul %40, %6, %cst_15 {dimension_numbers = #tpu.dot_dimension_numbers<[1], [0], [0], [1], [0, 0, 1, 1], [], []>} : vector<16x16xbf16>, vector<16x16xbf16>, vector<16x16xf32> -> vector<16x16xf32>
    %43 = arith.truncf %42 : vector<16x16xf32> to vector<16x16xbf16>
    %cst_16 = arith.constant dense<0.000000e+00> : vector<16x16xf32>
    %44 = tpu.matmul %16, %43, %cst_16 {dimension_numbers = #tpu.dot_dimension_numbers<[1], [0], [0], [1], [0, 0, 1, 1], [], []>} : vector<16x16xbf16>, vector<16x16xbf16>, vector<16x16xf32> -> vector<16x16xf32>
    %45 = vector.broadcast %41 : vector<1x16xf32> to vector<16x16xf32>
    %46 = arith.addf %44, %45 : vector<16x16xf32>
    %cst_17 = arith.constant 0.000000e+00 : f32
    %47 = vector.broadcast %cst_17 : f32 to vector<16x16xf32>
    %48 = arith.maximumf %46, %47 : vector<16x16xf32>
    %49 = vector.extract_strided_slice %48 {offsets = [0, 0], sizes = [8, 16], strides = [1, 1]} : vector<16x16xf32> to vector<8x16xf32>
    %cst_18 = arith.constant dense<0.000000e+00> : vector<16xf32>
    %50 = vector.multi_reduction <add>, %49, %cst_18 [0] : vector<8x16xf32> to vector<16xf32>
    %51 = vector.shape_cast %50 : vector<16xf32> to vector<1x16xf32>
    %52 = vector.extract_strided_slice %48 {offsets = [8, 0], sizes = [8, 16], strides = [1, 1]} : vector<16x16xf32> to vector<8x16xf32>
    %cst_19 = arith.constant dense<0.000000e+00> : vector<16xf32>
    %53 = vector.multi_reduction <add>, %52, %cst_19 [0] : vector<8x16xf32> to vector<16xf32>
    %54 = vector.shape_cast %53 : vector<16xf32> to vector<1x16xf32>
    %55 = tpu.concatenate %51, %54 in 0 : vector<1x16xf32>, vector<1x16xf32> -> vector<2x16xf32>
    %56 = arith.truncf %55 : vector<2x16xf32> to vector<2x16xbf16>
    %cst_20 = arith.constant dense<0.000000e+00> : vector<2x16xf32>
    %57 = tpu.matmul %56, %8, %cst_20 {dimension_numbers = #tpu.dot_dimension_numbers<[1], [0], [0], [1], [0, 0, 1, 1], [], []>} : vector<2x16xbf16>, vector<16x16xbf16>, vector<2x16xf32> -> vector<2x16xf32>
    %cst_21 = arith.constant dense<0.000000e+00> : vector<2x16xf32>
    %58 = tpu.matmul %19, %10, %cst_21 {dimension_numbers = #tpu.dot_dimension_numbers<[1], [0], [0], [1], [0, 0, 1, 1], [], []>} : vector<2x4xbf16>, vector<4x16xbf16>, vector<2x16xf32> -> vector<2x16xf32>
    %59 = arith.addf %57, %58 : vector<2x16xf32>
    %60 = vector.extract_strided_slice %0 {offsets = [91, 0], sizes = [1, 16], strides = [1, 1]} : vector<96x16xf32> to vector<1x16xf32>
    %61 = vector.broadcast %60 : vector<1x16xf32> to vector<2x16xf32>
    %62 = arith.addf %59, %61 : vector<2x16xf32>
    %cst_22 = arith.constant 0.000000e+00 : f32
    %63 = vector.broadcast %cst_22 : f32 to vector<2x16xf32>
    %64 = arith.maximumf %62, %63 : vector<2x16xf32>
    %65 = arith.truncf %64 : vector<2x16xf32> to vector<2x16xbf16>
    %cst_23 = arith.constant dense<0.000000e+00> : vector<2x16xf32>
    %66 = tpu.matmul %65, %12, %cst_23 {dimension_numbers = #tpu.dot_dimension_numbers<[1], [0], [0], [1], [0, 0, 1, 1], [], []>} : vector<2x16xbf16>, vector<16x16xbf16>, vector<2x16xf32> -> vector<2x16xf32>
    %67 = vector.extract_strided_slice %0 {offsets = [92, 0], sizes = [1, 16], strides = [1, 1]} : vector<96x16xf32> to vector<1x16xf32>
    %68 = vector.broadcast %67 : vector<1x16xf32> to vector<2x16xf32>
    %69 = arith.addf %66, %68 : vector<2x16xf32>
    %cst_24 = arith.constant 0.000000e+00 : f32
    %70 = vector.broadcast %cst_24 : f32 to vector<2x16xf32>
    %71 = arith.maximumf %69, %70 : vector<2x16xf32>
    %72 = vector.broadcast %13 : vector<1x16xf32> to vector<2x16xf32>
    %73 = arith.mulf %71, %72 : vector<2x16xf32>
    %cst_25 = arith.constant dense<0.000000e+00> : vector<2xf32>
    %74 = vector.multi_reduction <add>, %73, %cst_25 [1] : vector<2x16xf32> to vector<2xf32>
    %75 = vector.shape_cast %74 : vector<2xf32> to vector<2x1xf32>
    %76 = vector.extract_strided_slice %0 {offsets = [93, 0], sizes = [1, 1], strides = [1, 1]} : vector<96x16xf32> to vector<1x1xf32>
    %77 = vector.broadcast %76 : vector<1x1xf32> to vector<2x1xf32>
    %78 = arith.addf %75, %77 : vector<2x1xf32>
    %c0_26 = arith.constant 0 : index
    %c0_27 = arith.constant 0 : index
    %c0_28 = arith.constant 0 : index
    %79 = vector.load %arg5[%c0_26, %c0_27, %c0_28] : memref<1x2x1xf32, #tpu.memory_space<vmem>>, vector<1x2x1xf32>
    %80 = vector.shape_cast %79 : vector<1x2x1xf32> to vector<2x1xf32>
    %81 = vector.shape_cast %78 : vector<2x1xf32> to vector<1x2x1xf32>
    tpu.vector_store %arg5[%c0_26, %c0_27, %c0_28], %81 {strides = array<i32>} : memref<1x2x1xf32, #tpu.memory_space<vmem>>, vector<1x2x1xf32>,
    return
  }
  func.func @transform_0(%arg0: i32) -> (i32, i32, i32) {
    %c0_i32 = arith.constant 0 : i32
    %c0_i32_0 = arith.constant 0 : i32
    %c0_i32_1 = arith.constant 0 : i32
    return %arg0, %c0_i32, %c0_i32_0 : i32, i32, i32
  }
  func.func @transform_1(%arg0: i32) -> (i32, i32, i32) {
    %c0_i32 = arith.constant 0 : i32
    %c0_i32_0 = arith.constant 0 : i32
    %c0_i32_1 = arith.constant 0 : i32
    return %arg0, %c0_i32, %c0_i32_0 : i32, i32, i32
  }
  func.func @transform_2(%arg0: i32) -> (i32, i32, i32) {
    %c0_i32 = arith.constant 0 : i32
    %c0_i32_0 = arith.constant 0 : i32
    %c0_i32_1 = arith.constant 0 : i32
    return %arg0, %c0_i32, %c0_i32_0 : i32, i32, i32
  }
  func.func @transform_3(%arg0: i32) -> (i32, i32) {
    %c0_i32 = arith.constant 0 : i32
    %c0_i32_0 = arith.constant 0 : i32
    %c0_i32_1 = arith.constant 0 : i32
    return %c0_i32, %c0_i32_0 : i32, i32
  }
  func.func @transform_4(%arg0: i32) -> (i32, i32, i32) {
    %c0_i32 = arith.constant 0 : i32
    %c0_i32_0 = arith.constant 0 : i32
    %c0_i32_1 = arith.constant 0 : i32
    return %arg0, %c0_i32, %c0_i32_0 : i32, i32, i32
  }
}

</mosaic_0001>

<llo_original>
// kernel: net_forward.1
$region0: #{net_forward.1}
  #allocation0 [shape = 'u32[]', space=smem, size = 0x4, offset = 0x4, fixed_abs, tag = 'smem constant byte address 0x4 - core index']
  #allocation1 [shape = 'u32[144,128]{1,0:T(1,128)}', space=vmem, size = 0x12000, scoped, tag = 'internal scratch']
  %s0 = inlined_call_operand.vmem [shape: f32[4,16,16], index: 0, kind: input, shape index: {}]
  %s1 = inlined_call_operand.vmem [shape: f32[4,16,4], index: 1, kind: input, shape index: {}]
  %s2 = inlined_call_operand.vmem [shape: f32[4,2,4], index: 2, kind: input, shape index: {}]
  %s3 = inlined_call_operand.vmem [shape: f32[96,16], index: 3, kind: input, shape index: {}]
  %s4 = inlined_call_operand.vmem [shape: f32[4,2,1], index: 4, kind: output, shape index: {}]
  %s5 = sld [smem:[#allocation0]]
  $region49: #{net_forward.1} parent=0
    _
  %s7 = ssub.s32 1, %s5
  %s8 = scalar_select 0, %s7, %s5
  loop: start=0, step=1, limit=6
  $region2: #{net_forward.1} parent=0 // loop_pre_header
    _
  $region3: #{net_forward.1} parent=0 // loop_header
    %s10 = sphi 0, %s14
    %p11 = scmp.ge.s32.totalorder %s10, 6
    %s20 = sphi 0, %s22
    %s23 = sphi 0, %s20
    %s24 = sphi 0, %s23
    %s40 = sphi 0, %s24
    %s46 = sphi 0, %s48
    %s49 = sphi 0, %s46
    %s50 = sphi 0, %s49
    %s66 = sphi 0, %s50
    %s72 = sphi 0, %s74
    %s75 = sphi 0, %s72
    %s76 = sphi 0, %s75
    %s92 = sphi 0, %s76
    %s96 = sphi 0, %s96
    %s98 = sphi 0, %s96
    %s99 = sphi 0, %s98
    %s113 = sphi 0, %s99
    %s119 = sphi 0, %s121
    %s122 = sphi 0, %s119
    %s123 = sphi 0, %s122
    %s139 = sphi 0, %s123
  $region4: #{net_forward.1} parent=0 // loop_header_branch
    %13 = sbr.rel (%p11) target = $region8
  $region5: #{net_forward.1} parent=0 // loop_body
    %s15 = ssub.s32 %s10, 1
    %s16 = ssub.s32 %s10, 2
    %s17 = sadd.s32 %s10, 1
    %s18 = ssub.s32 %s10, %s17
    %p19 = scmp.eq.s32.totalorder %s18, 0
    %s21 = sadd.s32 %s20, 1
    %s22 = scalar_select %p19, %s20, %s21
    %p25 = pneg %p19
    %p26 = scmp.eq.s32.totalorder %s10, 3
    %p27 = por %p25, %p26
    %p28 = scmp.ne.s32.totalorder %s20, %s23
    %p29 = scmp.eq.s32.totalorder %s10, 0
    %p30 = por %p28, %p29
    %p31 = scmp.ne.s32.totalorder %s20, %s23
    %p32 = scmp.eq.s32.totalorder %s15, 3
    %p33 = por %p31, %p32
    %p34 = scmp.ne.s32.totalorder %s23, %s24
    %p35 = scmp.eq.s32.totalorder %s15, 0
    %p36 = por %p34, %p35
    %p37 = scmp.ne.s32.totalorder %s23, %s24
    %p38 = scmp.eq.s32.totalorder %s16, 3
    %p39 = por %p37, %p38
    %p41 = scmp.ne.s32.totalorder %s24, %s40
    %p42 = scmp.eq.s32.totalorder %s16, 0
    %p43 = por %p41, %p42
    %s44 = ssub.s32 %s10, %s17
    %p45 = scmp.eq.s32.totalorder %s44, 0
    %s47 = sadd.s32 %s46, 1
    %s48 = scalar_select %p45, %s46, %s47
    %p51 = pneg %p45
    %p52 = scmp.eq.s32.totalorder %s10, 3
    %p53 = por %p51, %p52
    %p54 = scmp.ne.s32.totalorder %s46, %s49
    %p55 = scmp.eq.s32.totalorder %s10, 0
    %p56 = por %p54, %p55
    %p57 = scmp.ne.s32.totalorder %s46, %s49
    %p58 = scmp.eq.s32.totalorder %s15, 3
    %p59 = por %p57, %p58
    %p60 = scmp.ne.s32.totalorder %s49, %s50
    %p61 = scmp.eq.s32.totalorder %s15, 0
    %p62 = por %p60, %p61
    %p63 = scmp.ne.s32.totalorder %s49, %s50
    %p64 = scmp.eq.s32.totalorder %s16, 3
    %p65 = por %p63, %p64
    %p67 = scmp.ne.s32.totalorder %s50, %s66
    %p68 = scmp.eq.s32.totalorder %s16, 0
    %p69 = por %p67, %p68
    %s70 = ssub.s32 %s10, %s17
    %p71 = scmp.eq.s32.totalorder %s70, 0
    %s73 = sadd.s32 %s72, 1
    %s74 = scalar_select %p71, %s72, %s73
    %p77 = pneg %p71
    %p78 = scmp.eq.s32.totalorder %s10, 3
    %p79 = por %p77, %p78
    %p80 = scmp.ne.s32.totalorder %s72, %s75
    %p81 = scmp.eq.s32.totalorder %s10, 0
    %p82 = por %p80, %p81
    %p83 = scmp.ne.s32.totalorder %s72, %s75
    %p84 = scmp.eq.s32.totalorder %s15, 3
    %p85 = por %p83, %p84
    %p86 = scmp.ne.s32.totalorder %s75, %s76
    %p87 = scmp.eq.s32.totalorder %s15, 0
    %p88 = por %p86, %p87
    %p89 = scmp.ne.s32.totalorder %s75, %s76
    %p90 = scmp.eq.s32.totalorder %s16, 3
    %p91 = por %p89, %p90
    %p93 = scmp.ne.s32.totalorder %s76, %s92
    %p94 = scmp.eq.s32.totalorder %s16, 0
    %p95 = por %p93, %p94
    %s97 = sadd.s32 %s96, 1
    %p100 = scmp.eq.s32.totalorder %s10, 3
    %p101 = scmp.ne.s32.totalorder %s96, %s98
    %p102 = scmp.eq.s32.totalorder %s10, 0
    %p103 = por %p101, %p102
    %p104 = scmp.ne.s32.totalorder %s96, %s98
    %p105 = scmp.eq.s32.totalorder %s15, 3
    %p106 = por %p104, %p105
    %p107 = scmp.ne.s32.totalorder %s98, %s99
    %p108 = scmp.eq.s32.totalorder %s15, 0
    %p109 = por %p107, %p108
    %p110 = scmp.ne.s32.totalorder %s98, %s99
    %p111 = scmp.eq.s32.totalorder %s16, 3
    %p112 = por %p110, %p111
    %p114 = scmp.ne.s32.totalorder %s99, %s113
    %p115 = scmp.eq.s32.totalorder %s16, 0
    %p116 = por %p114, %p115
    %s117 = ssub.s32 %s10, %s17
    %p118 = scmp.eq.s32.totalorder %s117, 0
    %s120 = sadd.s32 %s119, 1
    %s121 = scalar_select %p118, %s119, %s120
    %p124 = pneg %p118
    %p125 = scmp.eq.s32.totalorder %s10, 3
    %p126 = por %p124, %p125
    %p127 = scmp.ne.s32.totalorder %s119, %s122
    %p128 = scmp.eq.s32.totalorder %s10, 0
    %p129 = por %p127, %p128
    %p130 = scmp.ne.s32.totalorder %s119, %s122
    %p131 = scmp.eq.s32.totalorder %s15, 3
    %p132 = por %p130, %p131
    %p133 = scmp.ne.s32.totalorder %s122, %s123
    %p134 = scmp.eq.s32.totalorder %s15, 0
    %p135 = por %p133, %p134
    %p136 = scmp.ne.s32.totalorder %s122, %s123
    %p137 = scmp.eq.s32.totalorder %s16, 3
    %p138 = por %p136, %p137
    %p140 = scmp.ne.s32.totalorder %s123, %s139
    %p141 = scmp.eq.s32.totalorder %s16, 0
    %p142 = por %p140, %p141
    %p143 = scmp.le.s32.totalorder 1, %s10
    %p144 = scmp.lt.s32.totalorder %s10, 5
    %p145 = pnand %p143, %p144
    %p146 = pneg %p145
    // Predicated region
    $region9: #{net_forward.1} parent=5 // pred_check
      _
    $region10: #{net_forward.1} parent=5 // pred_check_branch
      %148 = sbr.rel (%p145) target = $region12
    $region11: #{net_forward.1} parent=5 // pred_region
      %s149 = ssub.s32 %s10, 1
      // Predicated region
      $region13: #{net_forward.1} parent=11 // pred_check
        %p150 = pneg %p109
      $region14: #{net_forward.1} parent=11 // pred_check_branch
        %152 = sbr.rel (%p150) target = $region16
      $region15: #{net_forward.1} parent=11 // pred_region
        _
      $region16: #{net_forward.1} parent=11 // pred_fallthru
        _
    $region12: #{net_forward.1} parent=5 // pred_fallthru
      _
    %p153 = scmp.lt.s32.totalorder %s10, 4
    // Predicated region
    $region17: #{net_forward.1} parent=5 // pred_check
      %p154 = pneg %p153
    $region18: #{net_forward.1} parent=5 // pred_check_branch
      %156 = sbr.rel (%p154) target = $region20
    $region19: #{net_forward.1} parent=5 // pred_region
      // Predicated region
      $region21: #{net_forward.1} parent=19 // pred_check
        %p157 = pneg %p30
      $region22: #{net_forward.1} parent=19 // pred_check_branch
        %159 = sbr.rel (%p157) target = $region24
      $region23: #{net_forward.1} parent=19 // pred_region
        %p160 = scmp.lt.s32.totalorder %s10, 3
        %s161 = scalar_select %p160, %s10, 3
        %s162 = smul.addr %s161, 2
        %s163 = smul.addr %s162, 8
        %s164 = scalar_lea.vmem %s0, %s163
      $region24: #{net_forward.1} parent=19 // pred_fallthru
        _
      // Predicated region
      $region25: #{net_forward.1} parent=19 // pred_check
        %p165 = pneg %p56
      $region26: #{net_forward.1} parent=19 // pred_check_branch
        %167 = sbr.rel (%p165) target = $region28
      $region27: #{net_forward.1} parent=19 // pred_region
        %p168 = scmp.lt.s32.totalorder %s10, 3
        %s169 = scalar_select %p168, %s10, 3
        %s170 = smul.addr %s169, 2
        %s171 = smul.addr %s170, 8
        %s172 = scalar_lea.vmem %s1, %s171
      $region28: #{net_forward.1} parent=19 // pred_fallthru
        _
      // Predicated region
      $region29: #{net_forward.1} parent=19 // pred_check
        %p173 = pneg %p82
      $region30: #{net_forward.1} parent=19 // pred_check_branch
        %175 = sbr.rel (%p173) target = $region32
      $region31: #{net_forward.1} parent=19 // pred_region
        %p176 = scmp.lt.s32.totalorder %s10, 3
        %s177 = scalar_select %p176, %s10, 3
        %s178 = smul.addr %s177, 2
        %s179 = scalar_lea.vmem %s2, %s178
      $region32: #{net_forward.1} parent=19 // pred_fallthru
        _
    $region20: #{net_forward.1} parent=5 // pred_fallthru
      _
    %p180 = scmp.le.s32.totalorder 1, %s10
    %p181 = scmp.lt.s32.totalorder %s10, 5
    %p182 = pnand %p180, %p181
    %p183 = pneg %p182
    // Predicated region
    $region33: #{net_forward.1} parent=5 // pred_check
      _
    $region34: #{net_forward.1} parent=5 // pred_check_branch
      %185 = sbr.rel (%p182) target = $region36
    $region35: #{net_forward.1} parent=5 // pred_region
      %s186 = ssub.s32 %s10, 1
      %p187 = scmp.lt.s32.totalorder %s15, 3
      %s188 = scalar_select %p187, %s15, 3
      %s189 = smul.addr %s188, 2
      %s190 = smul.addr %s189, 8
      %s191 = scalar_lea.vmem %s0, %s190
      %p192 = pneg %p36
      %p193 = pneg %p33
      %p194 = scmp.lt.s32.totalorder %s15, 3
      %s195 = scalar_select %p194, %s15, 3
      %s196 = smul.addr %s195, 2
      %s197 = smul.addr %s196, 8
      %s198 = scalar_lea.vmem %s1, %s197
      %p199 = pneg %p62
      %p200 = pneg %p59
      %p201 = scmp.lt.s32.totalorder %s15, 3
      %s202 = scalar_select %p201, %s15, 3
      %s203 = smul.addr %s202, 2
      %s204 = scalar_lea.vmem %s2, %s203
      %p205 = pneg %p88
      %p206 = pneg %p85
      %p207 = pneg %p109
      %p208 = pneg %p106
      %p209 = pneg %p135
      %p210 = pneg %p132
      %p211 = scmp.lt.s32.totalorder %s15, 3
      %s212 = scalar_select %p211, %s15, 3
      %s213 = smul.addr %s212, 2
      %s214 = scalar_lea.vmem %s4, %s213
      %p215 = scmp.lt.s32.totalorder %s15, 3
      %s216 = scalar_select %p215, %s15, 3
      %s217 = smul.addr %s216, 2
      %s218 = smul.addr %s217, 8
      %s219 = scalar_lea.vmem %s0, %s218
      %p220 = scmp.lt.s32.totalorder %s15, 3
      %s221 = scalar_select %p220, %s15, 3
      %s222 = smul.addr %s221, 2
      %s223 = smul.addr %s222, 8
      %s224 = scalar_lea.vmem %s1, %s223
      %p225 = scmp.lt.s32.totalorder %s15, 3
      %s226 = scalar_select %p225, %s15, 3
      %s227 = smul.addr %s226, 2
      %s228 = scalar_lea.vmem %s2, %s227
      %p229 = scmp.lt.s32.totalorder %s15, 3
      %s230 = scalar_select %p229, %s15, 3
      %s231 = smul.addr %s230, 2
      %s232 = scalar_lea.vmem %s4, %s231
      %v234 = vld [vmem:[%s3] sm:$0xff]
      %v235 = vld [vmem:[%s3 + $0x8] sm:$0xff]
      %v236 = vld [vmem:[%s3 + $0x10] sm:$0xff]
      %v237 = vld [vmem:[%s3 + $0x18] sm:$0xff]
      %v238 = vld [vmem:[%s3 + $0x20] sm:$0xff]
      %v239 = vld [vmem:[%s3 + $0x28] sm:$0xff]
      %v240 = vld [vmem:[%s3 + $0x30] sm:$0xff]
      %v241 = vld [vmem:[%s3 + $0x38] sm:$0xff]
      %v242 = vld [vmem:[%s3 + $0x40] sm:$0xff]
      %v243 = vld [vmem:[%s3 + $0x48] sm:$0xff]
      %v244 = vld [vmem:[%s3 + $0x50] sm:$0xff]
      %v245 = vld [vmem:[%s3 + $0x58] sm:$0xff]
      %v246 = vpack.c.bf16 %v234, %v234
      %v247 = vpack.c.bf16 %v236, %v235
      %v248 = vpack.c.bf16 %v238, %v237
      %v249 = vpack.c.bf16 %v240, %v239
      %v250 = vpack.c.bf16 %v241, %v241
      %v251 = vpack.c.bf16 %v243, %v242
      %v252 = vld [vmem:[%s219] sm:$0xff]
      %v253 = vld [vmem:[%s219 + $0x8] sm:$0xff]
      %v254 = vpack.c.bf16 %v253, %v252
      %v255 = vld [vmem:[%s228] sm:$0x3]
      %v256 = vpack.c.bf16 %v255, %v255
      %v257 = vld [vmem:[%s224] sm:$0xff]
      %v258 = vld [vmem:[%s224 + $0x8] sm:$0xff]
      %v259 = vpack.c.bf16 %v258, %v257
      %vm260 = vcmask 31744
      %v262 = vsel %vm260, %v259, 0
      %vm264 = vcmask 1041408
      %v266 = vsel %vm264, %v246, 0
      %268 = vmatprep.subr.bf16.mxu0 0
      %269 = vmatpush1.bf16.msra.mxu0 %v266
      %270 = vmatprep.subr.bf16.mxu0 0
      %271 = vmatpush1.bf16.msra.mxu0 0
      %272 = vmatprep.subr.bf16.mxu0 0
      %273 = vmatpush1.bf16.msra.mxu0 0
      %274 = vmatprep.subr.bf16.mxu0 0
      %275 = vmatpush1.bf16.msra.mxu0 0
      %276 = vmatprep.subr.bf16.mxu0 0
      %277 = vmatpush1.bf16.msra.mxu0 0
      %278 = vmatprep.subr.bf16.mxu0 0
      %279 = vmatpush1.bf16.msra.mxu0 0
      %280 = vmatprep.subr.bf16.mxu0 0
      %281 = vmatpush1.bf16.msra.mxu0 0
      %282 = vmatprep.subr.bf16.mxu0 0
      %283 = vmatpush1.bf16.msra.mxu0 0
      %284 = vmatprep.subr.bf16.mxu0 0
      %285 = vmatpush1.bf16.msra.mxu0 0
      %286 = vmatprep.subr.bf16.mxu0 0
      %287 = vmatpush1.bf16.msra.mxu0 0
      %288 = vmatprep.subr.bf16.mxu0 0
      %289 = vmatpush1.bf16.msra.mxu0 0
      %290 = vmatprep.subr.bf16.mxu0 0
      %291 = vmatpush1.bf16.msra.mxu0 0
      %292 = vmatprep.subr.bf16.mxu0 0
      %293 = vmatpush1.bf16.msra.mxu0 0
      %294 = vmatprep.subr.bf16.mxu0 0
      %295 = vmatpush1.bf16.msra.mxu0 0
      %296 = vmatprep.subr.bf16.mxu0 0
      %297 = vmatpush1.bf16.msra.mxu0 0
      %298 = vmatprep.subr.bf16.mxu0 0
      %299 = vmatpush1.bf16.msra.mxu0 0
      %300 = vmatprep.mubr.bf16.mxu0 0
      %301 = vmatmul.mubr.bf16.gmra.mrb[0].mxu0 %v262
      %v302 = vpop.f32.mrb[0].mxu0
      %v303 = vadd.f32 0.0, %v302
      %v304 = vpop.f32.mrb[0].mxu0
      %v305 = vpop.f32.mrb[0].mxu0
      %v306 = vadd.f32 0.0, %v305
      %v307 = vpop.f32.mrb[0].mxu0
      %308 = vdwg.mxu0
      %v309 = vpack.c.bf16 %v306, %v303
      %v310 = vlaneseq
      %v311 = vshrl.u32 %v310, 7
      %v312 = vsub.s32 0, %v311
      %v313 = vrot.slane %v245, %v312
      %vm314 = vcmask 130048
      %v316 = vsel %vm314, %v254, 0
      %318 = vmatprep.subr.bf16.mxu0 0
      %319 = vmatpush1.bf16.msra.mxu0 %v309
      %320 = vmatprep.subr.bf16.mxu0 0
      %321 = vmatpush1.bf16.msra.mxu0 0
      %322 = vmatprep.subr.bf16.mxu0 0
      %323 = vmatpush1.bf16.msra.mxu0 0
      %324 = vmatprep.subr.bf16.mxu0 0
      %325 = vmatpush1.bf16.msra.mxu0 0
      %326 = vmatprep.subr.bf16.mxu0 0
      %327 = vmatpush1.bf16.msra.mxu0 0
      %328 = vmatprep.subr.bf16.mxu0 0
      %329 = vmatpush1.bf16.msra.mxu0 0
      %330 = vmatprep.subr.bf16.mxu0 0
      %331 = vmatpush1.bf16.msra.mxu0 0
      %332 = vmatprep.subr.bf16.mxu0 0
      %333 = vmatpush1.bf16.msra.mxu0 0
      %334 = vmatprep.subr.bf16.mxu0 0
      %335 = vmatpush1.bf16.msra.mxu0 0
      %336 = vmatprep.subr.bf16.mxu0 0
      %337 = vmatpush1.bf16.msra.mxu0 0
      %338 = vmatprep.subr.bf16.mxu0 0
      %339 = vmatpush1.bf16.msra.mxu0 0
      %340 = vmatprep.subr.bf16.mxu0 0
      %341 = vmatpush1.bf16.msra.mxu0 0
      %342 = vmatprep.subr.bf16.mxu0 0
      %343 = vmatpush1.bf16.msra.mxu0 0
      %344 = vmatprep.subr.bf16.mxu0 0
      %345 = vmatpush1.bf16.msra.mxu0 0
      %346 = vmatprep.subr.bf16.mxu0 0
      %347 = vmatpush1.bf16.msra.mxu0 0
      %348 = vmatprep.subr.bf16.mxu0 0
      %349 = vmatpush1.bf16.msra.mxu0 0
      %350 = vmatprep.mubr.bf16.mxu0 0
      %351 = vmatmul.mubr.bf16.gmra.mrb[0].mxu0 %v316
      %v352 = vpop.f32.mrb[0].mxu0
      %v353 = vadd.f32 %v313, %v352
      %v354 = vpop.f32.mrb[0].mxu0
      %v355 = vpop.f32.mrb[0].mxu0
      %v356 = vadd.f32 %v313, %v355
      %v357 = vpop.f32.mrb[0].mxu0
      %358 = vdwg.mxu0
      %v359 = vmax.f32 %v353, 0.0
      %v360 = vmax.f32 %v356, 0.0
      %v361 = vpack.c.bf16 %v360, %v359
      %v363 = vsel %vm314, %v361, 0
      %365 = vmatprep.subr.bf16.mxu0 0
      %366 = vmatpush1.bf16.msra.mxu0 %v247
      %367 = vmatprep.subr.bf16.mxu0 0
      %368 = vmatpush1.bf16.msra.mxu0 0
      %369 = vmatprep.subr.bf16.mxu0 0
      %370 = vmatpush1.bf16.msra.mxu0 0
      %371 = vmatprep.subr.bf16.mxu0 0
      %372 = vmatpush1.bf16.msra.mxu0 0
      %373 = vmatprep.subr.bf16.mxu0 0
      %374 = vmatpush1.bf16.msra.mxu0 0
      %375 = vmatprep.subr.bf16.mxu0 0
      %376 = vmatpush1.bf16.msra.mxu0 0
      %377 = vmatprep.subr.bf16.mxu0 0
      %378 = vmatpush1.bf16.msra.mxu0 0
      %379 = vmatprep.subr.bf16.mxu0 0
      %380 = vmatpush1.bf16.msra.mxu0 0
      %381 = vmatprep.subr.bf16.mxu0 0
      %382 = vmatpush1.bf16.msra.mxu0 0
      %383 = vmatprep.subr.bf16.mxu0 0
      %384 = vmatpush1.bf16.msra.mxu0 0
      %385 = vmatprep.subr.bf16.mxu0 0
      %386 = vmatpush1.bf16.msra.mxu0 0
      %387 = vmatprep.subr.bf16.mxu0 0
      %388 = vmatpush1.bf16.msra.mxu0 0
      %389 = vmatprep.subr.bf16.mxu0 0
      %390 = vmatpush1.bf16.msra.mxu0 0
      %391 = vmatprep.subr.bf16.mxu0 0
      %392 = vmatpush1.bf16.msra.mxu0 0
      %393 = vmatprep.subr.bf16.mxu0 0
      %394 = vmatpush1.bf16.msra.mxu0 0
      %395 = vmatprep.subr.bf16.mxu0 0
      %396 = vmatpush1.bf16.msra.mxu0 0
      %397 = vmatprep.mubr.bf16.mxu0 0
      %398 = vmatmul.mubr.bf16.gmra.mrb[0].mxu0 %v363
      %v399 = vpop.f32.mrb[0].mxu0
      %v400 = vadd.f32 0.0, %v399
      %v401 = vpop.f32.mrb[0].mxu0
      %v402 = vpop.f32.mrb[0].mxu0
      %v403 = vadd.f32 0.0, %v402
      %v404 = vpop.f32.mrb[0].mxu0
      %405 = vdwg.mxu0
      %v406 = vpack.c.bf16 %v403, %v400
      %v407 = vlaneseq
      %v408 = vshrl.u32 %v407, 7
      %v409 = vsub.s32 1, %v408
      %v410 = vrot.slane %v245, %v409
      %411 = vmatprep.subr.bf16.mxu0 0
      %412 = vmatpush1.bf16.msra.mxu0 %v406
      %413 = vmatprep.subr.bf16.mxu0 0
      %414 = vmatpush1.bf16.msra.mxu0 0
      %415 = vmatprep.subr.bf16.mxu0 0
      %416 = vmatpush1.bf16.msra.mxu0 0
      %417 = vmatprep.subr.bf16.mxu0 0
      %418 = vmatpush1.bf16.msra.mxu0 0
      %419 = vmatprep.subr.bf16.mxu0 0
      %420 = vmatpush1.bf16.msra.mxu0 0
      %421 = vmatprep.subr.bf16.mxu0 0
      %422 = vmatpush1.bf16.msra.mxu0 0
      %423 = vmatprep.subr.bf16.mxu0 0
      %424 = vmatpush1.bf16.msra.mxu0 0
      %425 = vmatprep.subr.bf16.mxu0 0
      %426 = vmatpush1.bf16.msra.mxu0 0
      %427 = vmatprep.subr.bf16.mxu0 0
      %428 = vmatpush1.bf16.msra.mxu0 0
      %429 = vmatprep.subr.bf16.mxu0 0
      %430 = vmatpush1.bf16.msra.mxu0 0
      %431 = vmatprep.subr.bf16.mxu0 0
      %432 = vmatpush1.bf16.msra.mxu0 0
      %433 = vmatprep.subr.bf16.mxu0 0
      %434 = vmatpush1.bf16.msra.mxu0 0
      %435 = vmatprep.subr.bf16.mxu0 0
      %436 = vmatpush1.bf16.msra.mxu0 0
      %437 = vmatprep.subr.bf16.mxu0 0
      %438 = vmatpush1.bf16.msra.mxu0 0
      %439 = vmatprep.subr.bf16.mxu0 0
      %440 = vmatpush1.bf16.msra.mxu0 0
      %441 = vmatprep.subr.bf16.mxu0 0
      %442 = vmatpush1.bf16.msra.mxu0 0
      %443 = vmatprep.mubr.bf16.mxu0 0
      %444 = vmatmul.mubr.bf16.gmra.mrb[0].mxu0 %v316
      %v445 = vpop.f32.mrb[0].mxu0
      %v446 = vadd.f32 %v410, %v445
      %v447 = vpop.f32.mrb[0].mxu0
      %v448 = vpop.f32.mrb[0].mxu0
      %v449 = vadd.f32 %v410, %v448
      %v450 = vpop.f32.mrb[0].mxu0
      %451 = vdwg.mxu0
      %v452 = vmax.f32 %v446, 0.0
      %v453 = vmax.f32 %v449, 0.0
      %v454 = vpack.c.bf16 %v453, %v452
      %v456 = vsel %vm314, %v454, 0
      %458 = vmatprep.subr.bf16.mxu0 0
      %459 = vmatpush1.bf16.msra.mxu0 %v248
      %460 = vmatprep.subr.bf16.mxu0 0
      %461 = vmatpush1.bf16.msra.mxu0 0
      %462 = vmatprep.subr.bf16.mxu0 0
      %463 = vmatpush1.bf16.msra.mxu0 0
      %464 = vmatprep.subr.bf16.mxu0 0
      %465 = vmatpush1.bf16.msra.mxu0 0
      %466 = vmatprep.subr.bf16.mxu0 0
      %467 = vmatpush1.bf16.msra.mxu0 0
      %468 = vmatprep.subr.bf16.mxu0 0
      %469 = vmatpush1.bf16.msra.mxu0 0
      %470 = vmatprep.subr.bf16.mxu0 0
      %471 = vmatpush1.bf16.msra.mxu0 0
      %472 = vmatprep.subr.bf16.mxu0 0
      %473 = vmatpush1.bf16.msra.mxu0 0
      %474 = vmatprep.subr.bf16.mxu0 0
      %475 = vmatpush1.bf16.msra.mxu0 0
      %476 = vmatprep.subr.bf16.mxu0 0
      %477 = vmatpush1.bf16.msra.mxu0 0
      %478 = vmatprep.subr.bf16.mxu0 0
      %479 = vmatpush1.bf16.msra.mxu0 0
      %480 = vmatprep.subr.bf16.mxu0 0
      %481 = vmatpush1.bf16.msra.mxu0 0
      %482 = vmatprep.subr.bf16.mxu0 0
      %483 = vmatpush1.bf16.msra.mxu0 0
      %484 = vmatprep.subr.bf16.mxu0 0
      %485 = vmatpush1.bf16.msra.mxu0 0
      %486 = vmatprep.subr.bf16.mxu0 0
      %487 = vmatpush1.bf16.msra.mxu0 0
      %488 = vmatprep.subr.bf16.mxu0 0
      %489 = vmatpush1.bf16.msra.mxu0 0
      %490 = vmatprep.mubr.bf16.mxu0 0
      %491 = vmatmul.mubr.bf16.gmra.mrb[0].mxu0 %v456
      %v492 = vpop.f32.mrb[0].mxu0
      %v493 = vadd.f32 0.0, %v492
      %v494 = vpop.f32.mrb[0].mxu0
      %v495 = vpop.f32.mrb[0].mxu0
      %v496 = vadd.f32 0.0, %v495
      %v497 = vpop.f32.mrb[0].mxu0
      %498 = vdwg.mxu0
      %v499 = vpack.c.bf16 %v496, %v493
      %v500 = vlaneseq
      %v501 = vshrl.u32 %v500, 7
      %v502 = vsub.s32 2, %v501
      %v503 = vrot.slane %v245, %v502
      %504 = vmatprep.subr.bf16.mxu0 0
      %505 = vmatpush1.bf16.msra.mxu0 %v499
      %506 = vmatprep.subr.bf16.mxu0 0
      %507 = vmatpush1.bf16.msra.mxu0 0
      %508 = vmatprep.subr.bf16.mxu0 0
      %509 = vmatpush1.bf16.msra.mxu0 0
      %510 = vmatprep.subr.bf16.mxu0 0
      %511 = vmatpush1.bf16.msra.mxu0 0
      %512 = vmatprep.subr.bf16.mxu0 0
      %513 = vmatpush1.bf16.msra.mxu0 0
      %514 = vmatprep.subr.bf16.mxu0 0
      %515 = vmatpush1.bf16.msra.mxu0 0
      %516 = vmatprep.subr.bf16.mxu0 0
      %517 = vmatpush1.bf16.msra.mxu0 0
      %518 = vmatprep.subr.bf16.mxu0 0
      %519 = vmatpush1.bf16.msra.mxu0 0
      %520 = vmatprep.subr.bf16.mxu0 0
      %521 = vmatpush1.bf16.msra.mxu0 0
      %522 = vmatprep.subr.bf16.mxu0 0
      %523 = vmatpush1.bf16.msra.mxu0 0
      %524 = vmatprep.subr.bf16.mxu0 0
      %525 = vmatpush1.bf16.msra.mxu0 0
      %526 = vmatprep.subr.bf16.mxu0 0
      %527 = vmatpush1.bf16.msra.mxu0 0
      %528 = vmatprep.subr.bf16.mxu0 0
      %529 = vmatpush1.bf16.msra.mxu0 0
      %530 = vmatprep.subr.bf16.mxu0 0
      %531 = vmatpush1.bf16.msra.mxu0 0
      %532 = vmatprep.subr.bf16.mxu0 0
      %533 = vmatpush1.bf16.msra.mxu0 0
      %534 = vmatprep.subr.bf16.mxu0 0
      %535 = vmatpush1.bf16.msra.mxu0 0
      %536 = vmatprep.mubr.bf16.mxu0 0
      %537 = vmatmul.mubr.bf16.gmra.mrb[0].mxu0 %v316
      %v538 = vpop.f32.mrb[0].mxu0
      %v539 = vadd.f32 %v503, %v538
      %v540 = vpop.f32.mrb[0].mxu0
      %v541 = vpop.f32.mrb[0].mxu0
      %v542 = vadd.f32 %v503, %v541
      %v543 = vpop.f32.mrb[0].mxu0
      %544 = vdwg.mxu0
      %v545 = vmax.f32 %v539, 0.0
      %v546 = vmax.f32 %v542, 0.0
      %v547 = vsel %vm314, %v545, 0.0
      %v548 = vrot.slane %v547, 4
      %v549 = vadd.f32 %v547, %v548
      %v550 = vrot.slane %v549, 2
      %v551 = vadd.f32 %v549, %v550
      %v552 = vrot.slane %v551, 1
      %v553 = vadd.f32 %v551, %v552
      %v554 = vsel %vm314, %v546, 0.0
      %v555 = vrot.slane %v554, 4
      %v556 = vadd.f32 %v554, %v555
      %v557 = vrot.slane %v556, 2
      %v558 = vadd.f32 %v556, %v557
      %v559 = vrot.slane %v558, 1
      %v560 = vadd.f32 %v558, %v559
      %vm561 = vcmask 1040384
      %v562 = vsel %vm561, %v553, %v560
      %v563 = vpack.c.bf16 %v562, %v562
      %v565 = vsel %vm260, %v256, 0
      %v568 = vsel %vm264, %v250, 0
      %570 = vmatprep.subr.bf16.mxu0 0
      %571 = vmatpush1.bf16.msra.mxu0 %v568
      %572 = vmatprep.subr.bf16.mxu0 0
      %573 = vmatpush1.bf16.msra.mxu0 0
      %574 = vmatprep.subr.bf16.mxu0 0
      %575 = vmatpush1.bf16.msra.mxu0 0
      %576 = vmatprep.subr.bf16.mxu0 0
      %577 = vmatpush1.bf16.msra.mxu0 0
      %578 = vmatprep.subr.bf16.mxu0 0
      %579 = vmatpush1.bf16.msra.mxu0 0
      %580 = vmatprep.subr.bf16.mxu0 0
      %581 = vmatpush1.bf16.msra.mxu0 0
      %582 = vmatprep.subr.bf16.mxu0 0
      %583 = vmatpush1.bf16.msra.mxu0 0
      %584 = vmatprep.subr.bf16.mxu0 0
      %585 = vmatpush1.bf16.msra.mxu0 0
      %586 = vmatprep.subr.bf16.mxu0 0
      %587 = vmatpush1.bf16.msra.mxu0 0
      %588 = vmatprep.subr.bf16.mxu0 0
      %589 = vmatpush1.bf16.msra.mxu0 0
      %590 = vmatprep.subr.bf16.mxu0 0
      %591 = vmatpush1.bf16.msra.mxu0 0
      %592 = vmatprep.subr.bf16.mxu0 0
      %593 = vmatpush1.bf16.msra.mxu0 0
      %594 = vmatprep.subr.bf16.mxu0 0
      %595 = vmatpush1.bf16.msra.mxu0 0
      %596 = vmatprep.subr.bf16.mxu0 0
      %597 = vmatpush1.bf16.msra.mxu0 0
      %598 = vmatprep.subr.bf16.mxu0 0
      %599 = vmatpush1.bf16.msra.mxu0 0
      %600 = vmatprep.subr.bf16.mxu0 0
      %601 = vmatpush1.bf16.msra.mxu0 0
      %602 = vmatprep.mubr.bf16.mxu0 0
      %603 = vmatmul.mubr.bf16.gmra.mrb[0].mxu0 %v565
      %v604 = vpop.f32.mrb[0].mxu0
      %v605 = vadd.f32 0.0, %v604
      %v606 = vpop.f32.mrb[0].mxu0
      %v607 = vpop.f32.mrb[0].mxu0
      %v608 = vpop.f32.mrb[0].mxu0
      %609 = vdwg.mxu0
      %v611 = vsel %vm314, %v563, 0
      %613 = vmatprep.subr.bf16.mxu0 0
      %614 = vmatpush1.bf16.msra.mxu0 %v249
      %615 = vmatprep.subr.bf16.mxu0 0
      %616 = vmatpush1.bf16.msra.mxu0 0
      %617 = vmatprep.subr.bf16.mxu0 0
      %618 = vmatpush1.bf16.msra.mxu0 0
      %619 = vmatprep.subr.bf16.mxu0 0
      %620 = vmatpush1.bf16.msra.mxu0 0
      %621 = vmatprep.subr.bf16.mxu0 0
      %622 = vmatpush1.bf16.msra.mxu0 0
      %623 = vmatprep.subr.bf16.mxu0 0
      %624 = vmatpush1.bf16.msra.mxu0 0
      %625 = vmatprep.subr.bf16.mxu0 0
      %626 = vmatpush1.bf16.msra.mxu0 0
      %627 = vmatprep.subr.bf16.mxu0 0
      %628 = vmatpush1.bf16.msra.mxu0 0
      %629 = vmatprep.subr.bf16.mxu0 0
      %630 = vmatpush1.bf16.msra.mxu0 0
      %631 = vmatprep.subr.bf16.mxu0 0
      %632 = vmatpush1.bf16.msra.mxu0 0
      %633 = vmatprep.subr.bf16.mxu0 0
      %634 = vmatpush1.bf16.msra.mxu0 0
      %635 = vmatprep.subr.bf16.mxu0 0
      %636 = vmatpush1.bf16.msra.mxu0 0
      %637 = vmatprep.subr.bf16.mxu0 0
      %638 = vmatpush1.bf16.msra.mxu0 0
      %639 = vmatprep.subr.bf16.mxu0 0
      %640 = vmatpush1.bf16.msra.mxu0 0
      %641 = vmatprep.subr.bf16.mxu0 0
      %642 = vmatpush1.bf16.msra.mxu0 0
      %643 = vmatprep.subr.bf16.mxu0 0
      %644 = vmatpush1.bf16.msra.mxu0 0
      %645 = vmatprep.mubr.bf16.mxu0 0
      %646 = vmatmul.mubr.bf16.gmra.mrb[0].mxu0 %v611
      %v647 = vpop.f32.mrb[0].mxu0
      %v648 = vadd.f32 %v605, %v647
      %v649 = vpop.f32.mrb[0].mxu0
      %v650 = vpop.f32.mrb[0].mxu0
      %v651 = vpop.f32.mrb[0].mxu0
      %652 = vdwg.mxu0
      %v653 = vlaneseq
      %v654 = vshrl.u32 %v653, 7
      %v655 = vsub.s32 3, %v654
      %v656 = vrot.slane %v245, %v655
      %v657 = vadd.f32 %v648, %v656
      %v658 = vmax.f32 %v657, 0.0
      %v659 = vpack.c.bf16 %v658, %v658
      %v660 = vlaneseq
      %v661 = vshrl.u32 %v660, 7
      %v662 = vsub.s32 4, %v661
      %v663 = vrot.slane %v245, %v662
      %v665 = vsel %vm314, %v659, 0
      %667 = vmatprep.subr.bf16.mxu0 0
      %668 = vmatpush1.bf16.msra.mxu0 %v251
      %669 = vmatprep.subr.bf16.mxu0 0
      %670 = vmatpush1.bf16.msra.mxu0 0
      %671 = vmatprep.subr.bf16.mxu0 0
      %672 = vmatpush1.bf16.msra.mxu0 0
      %673 = vmatprep.subr.bf16.mxu0 0
      %674 = vmatpush1.bf16.msra.mxu0 0
      %675 = vmatprep.subr.bf16.mxu0 0
      %676 = vmatpush1.bf16.msra.mxu0 0
      %677 = vmatprep.subr.bf16.mxu0 0
      %678 = vmatpush1.bf16.msra.mxu0 0
      %679 = vmatprep.subr.bf16.mxu0 0
      %680 = vmatpush1.bf16.msra.mxu0 0
      %681 = vmatprep.subr.bf16.mxu0 0
      %682 = vmatpush1.bf16.msra.mxu0 0
      %683 = vmatprep.subr.bf16.mxu0 0
      %684 = vmatpush1.bf16.msra.mxu0 0
      %685 = vmatprep.subr.bf16.mxu0 0
      %686 = vmatpush1.bf16.msra.mxu0 0
      %687 = vmatprep.subr.bf16.mxu0 0
      %688 = vmatpush1.bf16.msra.mxu0 0
      %689 = vmatprep.subr.bf16.mxu0 0
      %690 = vmatpush1.bf16.msra.mxu0 0
      %691 = vmatprep.subr.bf16.mxu0 0
      %692 = vmatpush1.bf16.msra.mxu0 0
      %693 = vmatprep.subr.bf16.mxu0 0
      %694 = vmatpush1.bf16.msra.mxu0 0
      %695 = vmatprep.subr.bf16.mxu0 0
      %696 = vmatpush1.bf16.msra.mxu0 0
      %697 = vmatprep.subr.bf16.mxu0 0
      %698 = vmatpush1.bf16.msra.mxu0 0
      %699 = vmatprep.mubr.bf16.mxu0 0
      %700 = vmatmul.mubr.bf16.gmra.mrb[0].mxu0 %v665
      %v701 = vpop.f32.mrb[0].mxu0
      %v702 = vadd.f32 %v663, %v701
      %v703 = vpop.f32.mrb[0].mxu0
      %v704 = vpop.f32.mrb[0].mxu0
      %v705 = vpop.f32.mrb[0].mxu0
      %706 = vdwg.mxu0
      %v707 = vmax.f32 %v702, 0.0
      %v708 = vlaneseq
      %v709 = vshrl.u32 %v708, 7
      %v710 = vsub.s32 0, %v709
      %v711 = vrot.slane %v244, %v710
      %v712 = vmul.f32 %v707, %v711
      %vm713 = vcmask 123904
      %v714 = vsel %vm713, %v712, 0.0
      %715 = vadd.xlane.f32.xlu0 %v714
      %v716 = vpop.xlane.xlu0 %715
      %v717 = vlaneseq
      %v718 = vshrl.u32 %v717, 7
      %v719 = vsub.s32 5, %v718
      %v720 = vrot.slane %v245, %v719
      %v721 = vadd.f32 %v716, %v720
      %vm722 = vcmask 1024
      %723 = vst.msk [vmem:[%s232] sm:$0x3] %vm722, %v721
      %p724 = scmp.lt.s32.totalorder %s15, 3
      %s725 = scalar_select %p724, %s15, 3
      %s726 = smul.addr %s725, 2
      %s727 = scalar_lea.vmem %s4, %s726
      // Predicated region
      $region37: #{net_forward.1} parent=35 // pred_check
        %p728 = pneg %p132
      $region38: #{net_forward.1} parent=35 // pred_check_branch
        %730 = sbr.rel (%p728) target = $region40
      $region39: #{net_forward.1} parent=35 // pred_region
        _
      $region40: #{net_forward.1} parent=35 // pred_fallthru
        _
    $region36: #{net_forward.1} parent=5 // pred_fallthru
      _
    %p731 = scmp.le.s32.totalorder 2, %s10
    // Predicated region
    $region41: #{net_forward.1} parent=5 // pred_check
      %p732 = pneg %p731
    $region42: #{net_forward.1} parent=5 // pred_check_branch
      %734 = sbr.rel (%p732) target = $region44
    $region43: #{net_forward.1} parent=5 // pred_region
      %s735 = ssub.s32 %s10, 2
      // Predicated region
      $region45: #{net_forward.1} parent=43 // pred_check
        %p736 = pneg %p138
      $region46: #{net_forward.1} parent=43 // pred_check_branch
        %738 = sbr.rel (%p736) target = $region48
      $region47: #{net_forward.1} parent=43 // pred_region
        %p739 = scmp.lt.s32.totalorder %s16, 3
        %s740 = scalar_select %p739, %s16, 3
        %s741 = smul.addr %s740, 2
        %s742 = scalar_lea.vmem %s4, %s741
      $region48: #{net_forward.1} parent=43 // pred_fallthru
        _
    $region44: #{net_forward.1} parent=5 // pred_fallthru
      _
  $region6: #{net_forward.1} parent=0 // loop_footer
    %s14 = sadd.s32 1, %s10
  $region7: #{net_forward.1} parent=0 // loop_footer_branch
    %9 = sbr.rel target = $region3
  $region8: #{net_forward.1} parent=0 // loop_exit
    _

</llo_original>
